<compile_context>
chip_gen: v6e
topology: v6e:2x2x1
jax: 0.10.0
libtpu: 0.0.40
codegen_flags: <defaults>
</compile_context>

<pallas_src>
import functools

import numpy as np
import jax
import jax.numpy as jnp
from jax.experimental import pallas as pl
from jax.experimental.pallas import tpu as pltpu

EPS = 1e-08


def _round_up(v, m):
    return ((v + m - 1) // m) * m


def _ccc_kernel(x_ref, y_ref, bins_ref, out_ref,
                sx_ref, sy_ref, sxx_ref, syy_ref, sxy_ref, *, n_valid):
    i = pl.program_id(0)
    tile = x_ref.shape[0]

    @pl.when(i == 0)
    def _init():
        sx_ref[...] = jnp.zeros_like(sx_ref)
        sy_ref[...] = jnp.zeros_like(sy_ref)
        sxx_ref[...] = jnp.zeros_like(sxx_ref)
        syy_ref[...] = jnp.zeros_like(syy_ref)
        sxy_ref[...] = jnp.zeros_like(sxy_ref)

    # Cast AFTER load: inputs stay in native dtype (e.g. bf16) on the HBM wire.
    x = x_ref[...].astype(jnp.float32)        # (tile, D) logits
    y = y_ref[...].astype(jnp.float32)        # (1, tile) lane-dense targets
    bins = bins_ref[...].astype(jnp.float32)  # (1, D), resident across steps

    # Softmax expectation over bins, divide hoisted out of the D-wide domain.
    m = jnp.max(x, axis=-1, keepdims=True)
    e = jnp.exp(x - m)
    num = jnp.sum(e * bins, axis=-1, keepdims=True)   # (tile, 1)
    den = jnp.sum(e, axis=-1, keepdims=True)          # (tile, 1)
    # approx=True would push this onto the EUP; kept exact for bitwise fidelity.
    xv = num * pl.reciprocal(den, approx=False)       # (tile, 1)

    # Mask padded remainder rows so they do not pollute the statistics.
    base = i * tile
    row_ids = jax.lax.broadcasted_iota(jnp.int32, (tile, 1), 0) + base
    col_ids = jax.lax.broadcasted_iota(jnp.int32, (1, tile), 1) + base
    xv = jnp.where(row_ids < n_valid, xv, 0.0)
    y = jnp.where(col_ids < n_valid, y, 0.0)

    # Single-pass sufficient statistics, accumulated in (1,1) VMEM scratch.
    sx_ref[...] += jnp.sum(xv, keepdims=True)
    sxx_ref[...] += jnp.sum(xv * xv, keepdims=True)
    sy_ref[...] += jnp.sum(y, keepdims=True)
    syy_ref[...] += jnp.sum(y * y, keepdims=True)
    # Cross term: lane-dense y against sublane-oriented xv via a tiny MXU dot.
    sxy_ref[...] += jnp.dot(y, xv, preferred_element_type=jnp.float32)

    @pl.when(i == pl.num_programs(0) - 1)
    def _finalize():
        n = jnp.float32(n_valid)
        s_x = sx_ref[...]
        s_y = sy_ref[...]
        s_xx = sxx_ref[...]
        s_yy = syy_ref[...]
        s_xy = sxy_ref[...]

        x_m = s_x / n
        y_m = s_y / n
        # Centered sums from raw sums (clamped against fp cancellation).
        vxx = jnp.maximum(s_xx - s_x * s_x / n, 0.0)
        vyy = jnp.maximum(s_yy - s_y * s_y / n, 0.0)
        vxy = s_xy - s_x * s_y / n

        rho = vxy / (jnp.sqrt(vxx) * jnp.sqrt(vyy) + EPS)
        # torch.std default is the unbiased estimator (ddof=1).
        x_var = vxx / (n - 1.0)
        y_var = vyy / (n - 1.0)
        x_s = jnp.sqrt(x_var)
        y_s = jnp.sqrt(y_var)
        ccc = 2.0 * rho * x_s * y_s / (x_var + y_var + (x_m - y_m) ** 2 + EPS)
        out_ref[...] = (1.0 - ccc).astype(out_ref.dtype)


def ccc_loss(x, y, digitize_num=20, value_range=(-1.0, 1.0), tile_rows=1024):
    """x: (N, digitize_num) logits, y: (N,) targets. Returns scalar 1 - CCC."""
    assert digitize_num > 1, "kernel implements the digitized (softmax-bins) path"
    D = digitize_num

    x = x.reshape(-1, D)                 # keep native dtype (bf16 stays bf16)
    y = y.reshape(-1)
    n = x.shape[0]
    assert y.shape[0] == n
    assert n > 1, "unbiased std (ddof=1) requires N > 1 (same as torch.std)"

    bins = jnp.asarray(
        np.linspace(value_range[0], value_range[1], num=D),
        dtype=jnp.float32,
    ).reshape(1, D)

    # Row tile: multiple of 128 so y's lane-dense (1, tile) block is aligned
    # and x's (tile, D) block has an 8-aligned sublane count.
    tile = min(int(tile_rows), _round_up(n, 128))
    tile = _round_up(tile, 128)
    n_pad = _round_up(n, tile)
    if n_pad != n:
        x = jnp.pad(x, ((0, n_pad - n), (0, 0)))
        y = jnp.pad(y, (0, n_pad - n))
    y = y.reshape(1, n_pad)              # lane-dense target layout

    grid = (n_pad // tile,)
    kernel = functools.partial(_ccc_kernel, n_valid=n)

    out = pl.pallas_call(
        kernel,
        out_shape=jax.ShapeDtypeStruct((1, 1), jnp.float32),
        grid=grid,
        in_specs=[
            pl.BlockSpec((tile, D), lambda i: (i, 0)),   # streamed logits tile
            pl.BlockSpec((1, tile), lambda i: (0, i)),   # streamed lane-dense y
            pl.BlockSpec((1, D), lambda i: (0, 0)),      # bins: resident
        ],
        out_specs=pl.BlockSpec((1, 1), lambda i: (0, 0)),
        scratch_shapes=[pltpu.VMEM((1, 1), jnp.float32) for _ in range(5)],
        compiler_params=pltpu.CompilerParams(
            dimension_semantics=("arbitrary",)),         # N axis is a reduction
        cost_estimate=pl.CostEstimate(
            flops=int(8 * n_pad * D + 32 * n_pad),
            transcendentals=int(n_pad * D),
            bytes_accessed=int(x.size * x.dtype.itemsize
                               + y.size * y.dtype.itemsize
                               + bins.size * 4 + 4),
        ),
    )(x, y, bins)
    return out[0, 0]


def _reference(x, y, digitize_num=20, value_range=(-1.0, 1.0)):
    # Pure-JAX reference mirroring the PyTorch forward (weight=None branch).
    bins = jnp.asarray(
        np.linspace(value_range[0], value_range[1], num=digitize_num),
        dtype=jnp.float32,
    ).reshape(1, -1)
    y = y.reshape(-1).astype(jnp.float32)
    p = jax.nn.softmax(x.astype(jnp.float32), axis=-1)
    xv = jnp.sum(bins * p, axis=-1).reshape(-1)
    vx = xv - jnp.mean(xv)
    vy = y - jnp.mean(y)
    rho = jnp.sum(vx * vy) / (
        jnp.sqrt(jnp.sum(vx ** 2)) * jnp.sqrt(jnp.sum(vy ** 2)) + EPS
    )
    x_m, y_m = jnp.mean(xv), jnp.mean(y)
    x_s = jnp.std(xv, ddof=1)
    y_s = jnp.std(y, ddof=1)
    ccc = 2 * rho * x_s * y_s / (x_s ** 2 + y_s ** 2 + (x_m - y_m) ** 2 + EPS)
    return 1 - ccc


if __name__ == "__main__":
    D = 20
    key = jax.random.PRNGKey(0)
    kx1, ky1, kx2, ky2 = jax.random.split(key, 4)

    # Case 1: small batch (N=8, digitize_num=20), single tile, padded rows masked.
    x1 = jax.random.normal(kx1, (8, D), dtype=jnp.float32)
    y1 = jax.random.uniform(ky1, (8,), dtype=jnp.float32, minval=-1.0, maxval=1.0)
    loss1 = jax.block_until_ready(ccc_loss(x1, y1, digitize_num=D))
    ref1 = _reference(x1, y1, digitize_num=D)
    assert np.allclose(np.asarray(loss1), np.asarray(ref1), rtol=1e-4, atol=1e-4), (
        float(loss1), float(ref1))

    # Case 2: multi-tile streaming path (N=300, 128-row tiles -> grid of 3,
    # remainder rows masked inside the kernel).
    x2 = jax.random.normal(kx2, (300, D), dtype=jnp.float32)
    y2 = jax.random.uniform(ky2, (300,), dtype=jnp.float32, minval=-1.0, maxval=1.0)
    loss2 = jax.block_until_ready(ccc_loss(x2, y2, digitize_num=D, tile_rows=128))
    ref2 = _reference(x2, y2, digitize_num=D)
    assert np.allclose(np.asarray(loss2), np.asarray(ref2), rtol=1e-4, atol=1e-4), (
        float(loss2), float(ref2))

    print("KERNEL_OK")
</pallas_src>

<mosaic_0001>
module attributes {stable_mosaic.version = 11 : i64} {
  func.func @_ccc_kernel(%arg0: i32, %arg1: memref<128x20xf32, #tpu.memory_space<vmem>>, %arg2: memref<1x128xf32, #tpu.memory_space<vmem>>, %arg3: memref<1x20xf32, #tpu.memory_space<vmem>>, %arg4: memref<1x1xf32, #tpu.memory_space<vmem>>, %arg5: memref<1x1xf32, #tpu.memory_space<vmem>>, %arg6: memref<1x1xf32, #tpu.memory_space<vmem>>, %arg7: memref<1x1xf32, #tpu.memory_space<vmem>>, %arg8: memref<1x1xf32, #tpu.memory_space<vmem>>, %arg9: memref<1x1xf32, #tpu.memory_space<vmem>>) attributes {dimension_semantics = [#tpu.dimension_semantics<arbitrary>], iteration_bounds = array<i64: 1>, scalar_prefetch = 0 : i64, scratch_operands = 5 : i64, tpu.core_type = #tpu.core_type<tc>, window_params = [{transform_indices = @transform_0, window_bounds = array<i64: 128, 20>}, {transform_indices = @transform_1, window_bounds = array<i64: 1, 128>}, {pipeline_mode = #tpu.pipeline_mode<synchronous>, transform_indices = @transform_2, window_bounds = array<i64: 1, 20>}, {pipeline_mode = #tpu.pipeline_mode<synchronous>, transform_indices = @transform_3, window_bounds = array<i64: 1, 1>}]} {
    %c0_i32 = arith.constant 0 : i32
    %0 = arith.cmpi eq, %arg0, %c0_i32 : i32
    %1 = arith.extui %0 : i1 to i32
    %c0_i32_0 = arith.constant 0 : i32
    %2 = arith.cmpi ne, %1, %c0_i32_0 : i32
    scf.if %2 {
      %cst_38 = arith.constant 0.000000e+00 : f32
      %75 = vector.broadcast %cst_38 : f32 to vector<1x1xf32>
      %c0_39 = arith.constant 0 : index
      %c0_40 = arith.constant 0 : index
      %76 = vector.load %arg5[%c0_39, %c0_40] : memref<1x1xf32, #tpu.memory_space<vmem>>, vector<1x1xf32>
      tpu.vector_store %arg5[%c0_39, %c0_40], %75 {strides = array<i32>} : memref<1x1xf32, #tpu.memory_space<vmem>>, vector<1x1xf32>,
      %cst_41 = arith.constant 0.000000e+00 : f32
      %77 = vector.broadcast %cst_41 : f32 to vector<1x1xf32>
      %c0_42 = arith.constant 0 : index
      %c0_43 = arith.constant 0 : index
      %78 = vector.load %arg6[%c0_42, %c0_43] : memref<1x1xf32, #tpu.memory_space<vmem>>, vector<1x1xf32>
      tpu.vector_store %arg6[%c0_42, %c0_43], %77 {strides = array<i32>} : memref<1x1xf32, #tpu.memory_space<vmem>>, vector<1x1xf32>,
      %cst_44 = arith.constant 0.000000e+00 : f32
      %79 = vector.broadcast %cst_44 : f32 to vector<1x1xf32>
      %c0_45 = arith.constant 0 : index
      %c0_46 = arith.constant 0 : index
      %80 = vector.load %arg7[%c0_45, %c0_46] : memref<1x1xf32, #tpu.memory_space<vmem>>, vector<1x1xf32>
      tpu.vector_store %arg7[%c0_45, %c0_46], %79 {strides = array<i32>} : memref<1x1xf32, #tpu.memory_space<vmem>>, vector<1x1xf32>,
      %cst_47 = arith.constant 0.000000e+00 : f32
      %81 = vector.broadcast %cst_47 : f32 to vector<1x1xf32>
      %c0_48 = arith.constant 0 : index
      %c0_49 = arith.constant 0 : index
      %82 = vector.load %arg8[%c0_48, %c0_49] : memref<1x1xf32, #tpu.memory_space<vmem>>, vector<1x1xf32>
      tpu.vector_store %arg8[%c0_48, %c0_49], %81 {strides = array<i32>} : memref<1x1xf32, #tpu.memory_space<vmem>>, vector<1x1xf32>,
      %cst_50 = arith.constant 0.000000e+00 : f32
      %83 = vector.broadcast %cst_50 : f32 to vector<1x1xf32>
      %c0_51 = arith.constant 0 : index
      %c0_52 = arith.constant 0 : index
      %84 = vector.load %arg9[%c0_51, %c0_52] : memref<1x1xf32, #tpu.memory_space<vmem>>, vector<1x1xf32>
      tpu.vector_store %arg9[%c0_51, %c0_52], %83 {strides = array<i32>} : memref<1x1xf32, #tpu.memory_space<vmem>>, vector<1x1xf32>,
    } else {
    }
    %c0 = arith.constant 0 : index
    %c0_1 = arith.constant 0 : index
    %3 = vector.load %arg1[%c0, %c0_1] : memref<128x20xf32, #tpu.memory_space<vmem>>, vector<128x20xf32>
    %c0_2 = arith.constant 0 : index
    %c0_3 = arith.constant 0 : index
    %4 = vector.load %arg2[%c0_2, %c0_3] : memref<1x128xf32, #tpu.memory_space<vmem>>, vector<1x128xf32>
    %c0_4 = arith.constant 0 : index
    %c0_5 = arith.constant 0 : index
    %5 = vector.load %arg3[%c0_4, %c0_5] : memref<1x20xf32, #tpu.memory_space<vmem>>, vector<1x20xf32>
    %cst = arith.constant dense<0xFF800000> : vector<128xf32>
    %6 = vector.multi_reduction <maximumf>, %3, %cst [1] : vector<128x20xf32> to vector<128xf32>
    %7 = vector.shape_cast %6 : vector<128xf32> to vector<128x1xf32>
    %8 = vector.broadcast %7 : vector<128x1xf32> to vector<128x20xf32>
    %9 = arith.subf %3, %8 : vector<128x20xf32>
    %10 = math.exp %9 : vector<128x20xf32>
    %11 = vector.broadcast %5 : vector<1x20xf32> to vector<128x20xf32>
    %12 = arith.mulf %10, %11 : vector<128x20xf32>
    %cst_6 = arith.constant dense<0.000000e+00> : vector<128xf32>
    %13 = vector.multi_reduction <add>, %12, %cst_6 [1] : vector<128x20xf32> to vector<128xf32>
    %14 = vector.shape_cast %13 : vector<128xf32> to vector<128x1xf32>
    %cst_7 = arith.constant dense<0.000000e+00> : vector<128xf32>
    %15 = vector.multi_reduction <add>, %10, %cst_7 [1] : vector<128x20xf32> to vector<128xf32>
    %16 = vector.shape_cast %15 : vector<128xf32> to vector<128x1xf32>
    %17 = tpu.reciprocal %16 : vector<128x1xf32> -> vector<128x1xf32>
    %18 = arith.mulf %14, %17 : vector<128x1xf32>
    %c128_i32 = arith.constant 128 : i32
    %19 = arith.muli %arg0, %c128_i32 : i32
    %20 = tpu.iota {dimensions = array<i32: 0>} : vector<128x1xi32>
    %21 = vector.broadcast %19 : i32 to vector<128x1xi32>
    %22 = arith.addi %20, %21 : vector<128x1xi32>
    %23 = tpu.iota {dimensions = array<i32: 1>} : vector<1x128xi32>
    %24 = vector.broadcast %19 : i32 to vector<1x128xi32>
    %25 = arith.addi %23, %24 : vector<1x128xi32>
    %c8_i32 = arith.constant 8 : i32
    %26 = vector.broadcast %c8_i32 : i32 to vector<128x1xi32>
    %27 = arith.cmpi slt, %22, %26 : vector<128x1xi32>
    %cst_8 = arith.constant 0.000000e+00 : f32
    %28 = vector.broadcast %cst_8 : f32 to vector<128x1xf32>
    %29 = arith.select %27, %18, %28 : vector<128x1xi1>, vector<128x1xf32>
    %c8_i32_9 = arith.constant 8 : i32
    %30 = vector.broadcast %c8_i32_9 : i32 to vector<1x128xi32>
    %31 = arith.cmpi slt, %25, %30 : vector<1x128xi32>
    %cst_10 = arith.constant 0.000000e+00 : f32
    %32 = vector.broadcast %cst_10 : f32 to vector<1x128xf32>
    %33 = arith.select %31, %4, %32 : vector<1x128xi1>, vector<1x128xf32>
    %c0_11 = arith.constant 0 : index
    %c0_12 = arith.constant 0 : index
    %34 = vector.load %arg5[%c0_11, %c0_12] : memref<1x1xf32, #tpu.memory_space<vmem>>, vector<1x1xf32>
    %35 = vector.shape_cast %29 : vector<128x1xf32> to vector<1x128x1xf32>
    %cst_13 = arith.constant dense<0.000000e+00> : vector<1xf32>
    %36 = vector.multi_reduction <add>, %35, %cst_13 [1, 2] : vector<1x128x1xf32> to vector<1xf32>
    %37 = vector.shape_cast %36 : vector<1xf32> to vector<1x1x1xf32>
    %38 = vector.extract %37[0, 0, 0] : f32 from vector<1x1x1xf32>
    %39 = vector.broadcast %38 : f32 to vector<1x1xf32>
    %40 = arith.addf %34, %39 : vector<1x1xf32>
    %c0_14 = arith.constant 0 : index
    %c0_15 = arith.constant 0 : index
    %41 = vector.load %arg5[%c0_14, %c0_15] : memref<1x1xf32, #tpu.memory_space<vmem>>, vector<1x1xf32>
    tpu.vector_store %arg5[%c0_14, %c0_15], %40 {strides = array<i32>} : memref<1x1xf32, #tpu.memory_space<vmem>>, vector<1x1xf32>,
    %c0_16 = arith.constant 0 : index
    %c0_17 = arith.constant 0 : index
    %42 = vector.load %arg7[%c0_16, %c0_17] : memref<1x1xf32, #tpu.memory_space<vmem>>, vector<1x1xf32>
    %43 = arith.mulf %29, %29 : vector<128x1xf32>
    %44 = vector.shape_cast %43 : vector<128x1xf32> to vector<1x128x1xf32>
    %cst_18 = arith.constant dense<0.000000e+00> : vector<1xf32>
    %45 = vector.multi_reduction <add>, %44, %cst_18 [1, 2] : vector<1x128x1xf32> to vector<1xf32>
    %46 = vector.shape_cast %45 : vector<1xf32> to vector<1x1x1xf32>
    %47 = vector.extract %46[0, 0, 0] : f32 from vector<1x1x1xf32>
    %48 = vector.broadcast %47 : f32 to vector<1x1xf32>
    %49 = arith.addf %42, %48 : vector<1x1xf32>
    %c0_19 = arith.constant 0 : index
    %c0_20 = arith.constant 0 : index
    %50 = vector.load %arg7[%c0_19, %c0_20] : memref<1x1xf32, #tpu.memory_space<vmem>>, vector<1x1xf32>
    tpu.vector_store %arg7[%c0_19, %c0_20], %49 {strides = array<i32>} : memref<1x1xf32, #tpu.memory_space<vmem>>, vector<1x1xf32>,
    %c0_21 = arith.constant 0 : index
    %c0_22 = arith.constant 0 : index
    %51 = vector.load %arg6[%c0_21, %c0_22] : memref<1x1xf32, #tpu.memory_space<vmem>>, vector<1x1xf32>
    %52 = vector.shape_cast %33 : vector<1x128xf32> to vector<1x1x128xf32>
    %cst_23 = arith.constant dense<0.000000e+00> : vector<1xf32>
    %53 = vector.multi_reduction <add>, %52, %cst_23 [1, 2] : vector<1x1x128xf32> to vector<1xf32>
    %54 = vector.shape_cast %53 : vector<1xf32> to vector<1x1x1xf32>
    %55 = vector.extract %54[0, 0, 0] : f32 from vector<1x1x1xf32>
    %56 = vector.broadcast %55 : f32 to vector<1x1xf32>
    %57 = arith.addf %51, %56 : vector<1x1xf32>
    %c0_24 = arith.constant 0 : index
    %c0_25 = arith.constant 0 : index
    %58 = vector.load %arg6[%c0_24, %c0_25] : memref<1x1xf32, #tpu.memory_space<vmem>>, vector<1x1xf32>
    tpu.vector_store %arg6[%c0_24, %c0_25], %57 {strides = array<i32>} : memref<1x1xf32, #tpu.memory_space<vmem>>, vector<1x1xf32>,
    %c0_26 = arith.constant 0 : index
    %c0_27 = arith.constant 0 : index
    %59 = vector.load %arg8[%c0_26, %c0_27] : memref<1x1xf32, #tpu.memory_space<vmem>>, vector<1x1xf32>
    %60 = arith.mulf %33, %33 : vector<1x128xf32>
    %61 = vector.shape_cast %60 : vector<1x128xf32> to vector<1x1x128xf32>
    %cst_28 = arith.constant dense<0.000000e+00> : vector<1xf32>
    %62 = vector.multi_reduction <add>, %61, %cst_28 [1, 2] : vector<1x1x128xf32> to vector<1xf32>
    %63 = vector.shape_cast %62 : vector<1xf32> to vector<1x1x1xf32>
    %64 = vector.extract %63[0, 0, 0] : f32 from vector<1x1x1xf32>
    %65 = vector.broadcast %64 : f32 to vector<1x1xf32>
    %66 = arith.addf %59, %65 : vector<1x1xf32>
    %c0_29 = arith.constant 0 : index
    %c0_30 = arith.constant 0 : index
    %67 = vector.load %arg8[%c0_29, %c0_30] : memref<1x1xf32, #tpu.memory_space<vmem>>, vector<1x1xf32>
    tpu.vector_store %arg8[%c0_29, %c0_30], %66 {strides = array<i32>} : memref<1x1xf32, #tpu.memory_space<vmem>>, vector<1x1xf32>,
    %c0_31 = arith.constant 0 : index
    %c0_32 = arith.constant 0 : index
    %68 = vector.load %arg9[%c0_31, %c0_32] : memref<1x1xf32, #tpu.memory_space<vmem>>, vector<1x1xf32>
    %cst_33 = arith.constant dense<0.000000e+00> : vector<1x1xf32>
    %69 = tpu.matmul %33, %29, %cst_33 {dimension_numbers = #tpu.dot_dimension_numbers<[1], [0], [0], [1], [0, 0, 1, 1], [], []>} : vector<1x128xf32>, vector<128x1xf32>, vector<1x1xf32> -> vector<1x1xf32>
    %70 = arith.addf %68, %69 : vector<1x1xf32>
    %c0_34 = arith.constant 0 : index
    %c0_35 = arith.constant 0 : index
    %71 = vector.load %arg9[%c0_34, %c0_35] : memref<1x1xf32, #tpu.memory_space<vmem>>, vector<1x1xf32>
    tpu.vector_store %arg9[%c0_34, %c0_35], %70 {strides = array<i32>} : memref<1x1xf32, #tpu.memory_space<vmem>>, vector<1x1xf32>,
    %c0_i32_36 = arith.constant 0 : i32
    %72 = arith.cmpi eq, %arg0, %c0_i32_36 : i32
    %73 = arith.extui %72 : i1 to i32
    %c0_i32_37 = arith.constant 0 : i32
    %74 = arith.cmpi ne, %73, %c0_i32_37 : i32
    scf.if %74 {
      %c0_38 = arith.constant 0 : index
      %c0_39 = arith.constant 0 : index
      %75 = vector.load %arg5[%c0_38, %c0_39] : memref<1x1xf32, #tpu.memory_space<vmem>>, vector<1x1xf32>
      %c0_40 = arith.constant 0 : index
      %c0_41 = arith.constant 0 : index
      %76 = vector.load %arg6[%c0_40, %c0_41] : memref<1x1xf32, #tpu.memory_space<vmem>>, vector<1x1xf32>
      %c0_42 = arith.constant 0 : index
      %c0_43 = arith.constant 0 : index
      %77 = vector.load %arg7[%c0_42, %c0_43] : memref<1x1xf32, #tpu.memory_space<vmem>>, vector<1x1xf32>
      %c0_44 = arith.constant 0 : index
      %c0_45 = arith.constant 0 : index
      %78 = vector.load %arg8[%c0_44, %c0_45] : memref<1x1xf32, #tpu.memory_space<vmem>>, vector<1x1xf32>
      %c0_46 = arith.constant 0 : index
      %c0_47 = arith.constant 0 : index
      %79 = vector.load %arg9[%c0_46, %c0_47] : memref<1x1xf32, #tpu.memory_space<vmem>>, vector<1x1xf32>
      %cst_48 = arith.constant 8.000000e+00 : f32
      %80 = vector.broadcast %cst_48 : f32 to vector<1x1xf32>
      %81 = arith.divf %75, %80 : vector<1x1xf32>
      %cst_49 = arith.constant 8.000000e+00 : f32
      %82 = vector.broadcast %cst_49 : f32 to vector<1x1xf32>
      %83 = arith.divf %76, %82 : vector<1x1xf32>
      %84 = arith.mulf %75, %75 : vector<1x1xf32>
      %cst_50 = arith.constant 8.000000e+00 : f32
      %85 = vector.broadcast %cst_50 : f32 to vector<1x1xf32>
      %86 = arith.divf %84, %85 : vector<1x1xf32>
      %87 = arith.subf %77, %86 : vector<1x1xf32>
      %cst_51 = arith.constant 0.000000e+00 : f32
      %88 = vector.broadcast %cst_51 : f32 to vector<1x1xf32>
      %89 = arith.maximumf %87, %88 : vector<1x1xf32>
      %90 = arith.mulf %76, %76 : vector<1x1xf32>
      %cst_52 = arith.constant 8.000000e+00 : f32
      %91 = vector.broadcast %cst_52 : f32 to vector<1x1xf32>
      %92 = arith.divf %90, %91 : vector<1x1xf32>
      %93 = arith.subf %78, %92 : vector<1x1xf32>
      %cst_53 = arith.constant 0.000000e+00 : f32
      %94 = vector.broadcast %cst_53 : f32 to vector<1x1xf32>
      %95 = arith.maximumf %93, %94 : vector<1x1xf32>
      %96 = arith.mulf %75, %76 : vector<1x1xf32>
      %cst_54 = arith.constant 8.000000e+00 : f32
      %97 = vector.broadcast %cst_54 : f32 to vector<1x1xf32>
      %98 = arith.divf %96, %97 : vector<1x1xf32>
      %99 = arith.subf %79, %98 : vector<1x1xf32>
      %100 = math.sqrt %89 : vector<1x1xf32>
      %101 = math.sqrt %95 : vector<1x1xf32>
      %102 = arith.mulf %100, %101 : vector<1x1xf32>
      %cst_55 = arith.constant 9.99999993E-9 : f32
      %103 = vector.broadcast %cst_55 : f32 to vector<1x1xf32>
      %104 = arith.addf %102, %103 : vector<1x1xf32>
      %105 = arith.divf %99, %104 : vector<1x1xf32>
      %cst_56 = arith.constant 8.000000e+00 : f32
      %cst_57 = arith.constant 1.000000e+00 : f32
      %106 = arith.subf %cst_56, %cst_57 : f32
      %107 = vector.broadcast %106 : f32 to vector<1x1xf32>
      %108 = arith.divf %89, %107 : vector<1x1xf32>
      %cst_58 = arith.constant 8.000000e+00 : f32
      %cst_59 = arith.constant 1.000000e+00 : f32
      %109 = arith.subf %cst_58, %cst_59 : f32
      %110 = vector.broadcast %109 : f32 to vector<1x1xf32>
      %111 = arith.divf %95, %110 : vector<1x1xf32>
      %112 = math.sqrt %108 : vector<1x1xf32>
      %113 = math.sqrt %111 : vector<1x1xf32>
      %cst_60 = arith.constant 2.000000e+00 : f32
      %114 = vector.broadcast %cst_60 : f32 to vector<1x1xf32>
      %115 = arith.mulf %114, %105 : vector<1x1xf32>
      %116 = arith.mulf %115, %112 : vector<1x1xf32>
      %117 = arith.mulf %116, %113 : vector<1x1xf32>
      %118 = arith.addf %108, %111 : vector<1x1xf32>
      %119 = arith.subf %81, %83 : vector<1x1xf32>
      %120 = arith.mulf %119, %119 : vector<1x1xf32>
      %121 = arith.addf %118, %120 : vector<1x1xf32>
      %cst_61 = arith.constant 9.99999993E-9 : f32
      %122 = vector.broadcast %cst_61 : f32 to vector<1x1xf32>
      %123 = arith.addf %121, %122 : vector<1x1xf32>
      %124 = arith.divf %117, %123 : vector<1x1xf32>
      %cst_62 = arith.constant 1.000000e+00 : f32
      %125 = vector.broadcast %cst_62 : f32 to vector<1x1xf32>
      %126 = arith.subf %125, %124 : vector<1x1xf32>
      %c0_63 = arith.constant 0 : index
      %c0_64 = arith.constant 0 : index
      %127 = vector.load %arg4[%c0_63, %c0_64] : memref<1x1xf32, #tpu.memory_space<vmem>>, vector<1x1xf32>
      tpu.vector_store %arg4[%c0_63, %c0_64], %126 {strides = array<i32>} : memref<1x1xf32, #tpu.memory_space<vmem>>, vector<1x1xf32>,
    } else {
    }
    return
  }
  func.func @transform_0(%arg0: i32) -> (i32, i32) {
    %c0_i32 = arith.constant 0 : i32
    %c0_i32_0 = arith.constant 0 : i32
    return %arg0, %c0_i32 : i32, i32
  }
  func.func @transform_1(%arg0: i32) -> (i32, i32) {
    %c0_i32 = arith.constant 0 : i32
    %c0_i32_0 = arith.constant 0 : i32
    return %c0_i32, %arg0 : i32, i32
  }
  func.func @transform_2(%arg0: i32) -> (i32, i32) {
    %c0_i32 = arith.constant 0 : i32
    %c0_i32_0 = arith.constant 0 : i32
    %c0_i32_1 = arith.constant 0 : i32
    return %c0_i32, %c0_i32_0 : i32, i32
  }
  func.func @transform_3(%arg0: i32) -> (i32, i32) {
    %c0_i32 = arith.constant 0 : i32
    %c0_i32_0 = arith.constant 0 : i32
    %c0_i32_1 = arith.constant 0 : i32
    return %c0_i32, %c0_i32_0 : i32, i32
  }
}

</mosaic_0001>

<llo_original>
// kernel: tpu_custom_call.1
$region0: #{tpu_custom_call.1}
  #allocation0 [shape = 'u32[]', space=smem, size = 0x4, offset = 0x4, fixed_abs, tag = 'smem constant byte address 0x4 - core index']
  #allocation1 [shape = 'u32[144,128]{1,0:T(1,128)}', space=vmem, size = 0x12000, scoped, tag = 'internal scratch']
  #allocation2 [shape = 'f32[1,1]{1,0:T(1,128)}', space=vmem, size = 0x200, scoped, tag = 'scratch operand']
  #allocation3 [shape = 'f32[1,1]{1,0:T(1,128)}', space=vmem, size = 0x200, scoped, tag = 'scratch operand']
  #allocation4 [shape = 'f32[1,1]{1,0:T(1,128)}', space=vmem, size = 0x200, scoped, tag = 'scratch operand']
  #allocation5 [shape = 'f32[1,1]{1,0:T(1,128)}', space=vmem, size = 0x200, scoped, tag = 'scratch operand']
  #allocation6 [shape = 'f32[1,1]{1,0:T(1,128)}', space=vmem, size = 0x200, scoped, tag = 'scratch operand']
  %s0 = inlined_call_operand.vmem [shape: f32[128,20], index: 0, kind: input, shape index: {}]
  %s1 = inlined_call_operand.vmem [shape: f32[1,128], index: 1, kind: input, shape index: {}]
  %s2 = inlined_call_operand.vmem [shape: f32[1,20], index: 2, kind: input, shape index: {}]
  %s3 = inlined_call_operand.hbm [shape: f32[1,1], index: 3, kind: output, shape index: {}]
  %s4 = sld [smem:[#allocation0]]
  $region30: #{tpu_custom_call.1} parent=0
    _
  %s6 = ssub.s32 1, %s4
  %s7 = scalar_select 0, %s6, %s4
  $region1: #{tpu_custom_call.1} parent=0
    #allocation7 [shape = 'u8[512]{0}', space=vmem, size = 0x400, scoped, tag = 'output window, operand 0, single buffered']
    #allocation8 [shape = 's32[1]{0}', space=sflag, size = 0x4, scoped, tag = 'scoped memory for tpu_custom_call.1']
    %8 = vsyncpa [#allocation8], 0
    // Predicated region
    $region2: #{tpu_custom_call.1} parent=1 // pred_check
      _
    $region3: #{tpu_custom_call.1} parent=1 // pred_check_branch
      %10 = sbr.rel (0) target = $region5
    $region4: #{tpu_custom_call.1} parent=1 // pred_region
      _
    $region5: #{tpu_custom_call.1} parent=1 // pred_fallthru
      _
    // Predicated region
    $region6: #{tpu_custom_call.1} parent=1 // pred_check
      _
    $region7: #{tpu_custom_call.1} parent=1 // pred_check_branch
      %12 = sbr.rel (0) target = $region9
    $region8: #{tpu_custom_call.1} parent=1 // pred_region
      _
    $region9: #{tpu_custom_call.1} parent=1 // pred_fallthru
      _
    // Predicated region
    $region10: #{tpu_custom_call.1} parent=1 // pred_check
      _
    $region11: #{tpu_custom_call.1} parent=1 // pred_check_branch
      %14 = sbr.rel (0) target = $region13
    $region12: #{tpu_custom_call.1} parent=1 // pred_region
      _
    $region13: #{tpu_custom_call.1} parent=1 // pred_fallthru
      _
    %p15 = scmp.eq.s32.totalorder 0, 0
    // Predicated region
    $region14: #{tpu_custom_call.1} parent=1 // pred_check
      %p16 = pneg %p15
    $region15: #{tpu_custom_call.1} parent=1 // pred_check_branch
      %18 = sbr.rel (%p16) target = $region17
    $region16: #{tpu_custom_call.1} parent=1 // pred_region
      %vm19 = vcmask 0
      %20 = vst.msk [vmem:[#allocation2] sm:$0x1] %vm19, 0.0
      %21 = vst.msk [vmem:[#allocation3] sm:$0x1] %vm19, 0.0
      %22 = vst.msk [vmem:[#allocation4] sm:$0x1] %vm19, 0.0
      %23 = vst.msk [vmem:[#allocation5] sm:$0x1] %vm19, 0.0
      %24 = vst.msk [vmem:[#allocation6] sm:$0x1] %vm19, 0.0
    $region17: #{tpu_custom_call.1} parent=1 // pred_fallthru
      _
    %v25 = vld [vmem:[%s0] sm:$0xff]
    %v26 = vld [vmem:[%s0 + $0x8] sm:$0xff]
    %v27 = vld [vmem:[%s0 + $0x10] sm:$0xff]
    %v28 = vld [vmem:[%s0 + $0x18] sm:$0xff]
    %v29 = vld [vmem:[%s0 + $0x20] sm:$0xff]
    %v30 = vld [vmem:[%s0 + $0x28] sm:$0xff]
    %v31 = vld [vmem:[%s0 + $0x30] sm:$0xff]
    %v32 = vld [vmem:[%s0 + $0x38] sm:$0xff]
    %v33 = vld [vmem:[%s0 + $0x40] sm:$0xff]
    %v34 = vld [vmem:[%s0 + $0x48] sm:$0xff]
    %v35 = vld [vmem:[%s0 + $0x50] sm:$0xff]
    %v36 = vld [vmem:[%s0 + $0x58] sm:$0xff]
    %v37 = vld [vmem:[%s0 + $0x60] sm:$0xff]
    %v38 = vld [vmem:[%s0 + $0x68] sm:$0xff]
    %v39 = vld [vmem:[%s0 + $0x70] sm:$0xff]
    %v40 = vld [vmem:[%s0 + $0x78] sm:$0xff]
    %v41 = vld [vmem:[%s1] sm:$0x1]
    %v42 = vld [vmem:[%s2] sm:$0x1]
    %vm43 = vcmask 162816
    %v44 = vsel %vm43, %v25, -inf
    %45 = vmax.xlane.f32.xlu0 %v44
    %v46 = vpop.xlane.xlu0 %45
    %v47 = vsel %vm43, %v26, -inf
    %48 = vmax.xlane.f32.xlu0 %v47
    %v49 = vpop.xlane.xlu0 %48
    %v50 = vsel %vm43, %v27, -inf
    %51 = vmax.xlane.f32.xlu0 %v50
    %v52 = vpop.xlane.xlu0 %51
    %v53 = vsel %vm43, %v28, -inf
    %54 = vmax.xlane.f32.xlu0 %v53
    %v55 = vpop.xlane.xlu0 %54
    %v56 = vsel %vm43, %v29, -inf
    %57 = vmax.xlane.f32.xlu0 %v56
    %v58 = vpop.xlane.xlu0 %57
    %v59 = vsel %vm43, %v30, -inf
    %60 = vmax.xlane.f32.xlu0 %v59
    %v61 = vpop.xlane.xlu0 %60
    %v62 = vsel %vm43, %v31, -inf
    %63 = vmax.xlane.f32.xlu0 %v62
    %v64 = vpop.xlane.xlu0 %63
    %v65 = vsel %vm43, %v32, -inf
    %66 = vmax.xlane.f32.xlu0 %v65
    %v67 = vpop.xlane.xlu0 %66
    %v68 = vsel %vm43, %v33, -inf
    %69 = vmax.xlane.f32.xlu0 %v68
    %v70 = vpop.xlane.xlu0 %69
    %v71 = vsel %vm43, %v34, -inf
    %72 = vmax.xlane.f32.xlu0 %v71
    %v73 = vpop.xlane.xlu0 %72
    %v74 = vsel %vm43, %v35, -inf
    %75 = vmax.xlane.f32.xlu0 %v74
    %v76 = vpop.xlane.xlu0 %75
    %v77 = vsel %vm43, %v36, -inf
    %78 = vmax.xlane.f32.xlu0 %v77
    %v79 = vpop.xlane.xlu0 %78
    %v80 = vsel %vm43, %v37, -inf
    %81 = vmax.xlane.f32.xlu0 %v80
    %v82 = vpop.xlane.xlu0 %81
    %v83 = vsel %vm43, %v38, -inf
    %84 = vmax.xlane.f32.xlu0 %v83
    %v85 = vpop.xlane.xlu0 %84
    %v86 = vsel %vm43, %v39, -inf
    %87 = vmax.xlane.f32.xlu0 %v86
    %v88 = vpop.xlane.xlu0 %87
    %v89 = vsel %vm43, %v40, -inf
    %90 = vmax.xlane.f32.xlu0 %v89
    %v91 = vpop.xlane.xlu0 %90
    %v92 = vsub.f32 %v25, %v46
    %v93 = vsub.f32 %v26, %v49
    %v94 = vsub.f32 %v27, %v52
    %v95 = vsub.f32 %v28, %v55
    %v96 = vsub.f32 %v29, %v58
    %v97 = vsub.f32 %v30, %v61
    %v98 = vsub.f32 %v31, %v64
    %v99 = vsub.f32 %v32, %v67
    %v100 = vsub.f32 %v33, %v70
    %v101 = vsub.f32 %v34, %v73
    %v102 = vsub.f32 %v35, %v76
    %v103 = vsub.f32 %v36, %v79
    %v104 = vsub.f32 %v37, %v82
    %v105 = vsub.f32 %v38, %v85
    %v106 = vsub.f32 %v39, %v88
    %v107 = vsub.f32 %v40, %v91
    %v108 = vmul.f32 %v92, 1.442695
    %v109 = vpow.pop %v108
    %v110 = vmul.f32 %v93, 1.442695
    %v111 = vpow.pop %v110
    %v112 = vmul.f32 %v94, 1.442695
    %v113 = vpow.pop %v112
    %v114 = vmul.f32 %v95, 1.442695
    %v115 = vpow.pop %v114
    %v116 = vmul.f32 %v96, 1.442695
    %v117 = vpow.pop %v116
    %v118 = vmul.f32 %v97, 1.442695
    %v119 = vpow.pop %v118
    %v120 = vmul.f32 %v98, 1.442695
    %v121 = vpow.pop %v120
    %v122 = vmul.f32 %v99, 1.442695
    %v123 = vpow.pop %v122
    %v124 = vmul.f32 %v100, 1.442695
    %v125 = vpow.pop %v124
    %v126 = vmul.f32 %v101, 1.442695
    %v127 = vpow.pop %v126
    %v128 = vmul.f32 %v102, 1.442695
    %v129 = vpow.pop %v128
    %v130 = vmul.f32 %v103, 1.442695
    %v131 = vpow.pop %v130
    %v132 = vmul.f32 %v104, 1.442695
    %v133 = vpow.pop %v132
    %v134 = vmul.f32 %v105, 1.442695
    %v135 = vpow.pop %v134
    %v136 = vmul.f32 %v106, 1.442695
    %v137 = vpow.pop %v136
    %v138 = vmul.f32 %v107, 1.442695
    %v139 = vpow.pop %v138
    %v141 = vlaneseq
    %v142 = vshrl.u32 %v141, 7
    %v143 = vsub.s32 0, %v142
    %v144 = vrot.slane %v42, %v143
    %v146 = vmul.f32 %v109, %v144
    %v147 = vmul.f32 %v111, %v144
    %v148 = vmul.f32 %v113, %v144
    %v149 = vmul.f32 %v115, %v144
    %v150 = vmul.f32 %v117, %v144
    %v151 = vmul.f32 %v119, %v144
    %v152 = vmul.f32 %v121, %v144
    %v153 = vmul.f32 %v123, %v144
    %v154 = vmul.f32 %v125, %v144
    %v155 = vmul.f32 %v127, %v144
    %v156 = vmul.f32 %v129, %v144
    %v157 = vmul.f32 %v131, %v144
    %v158 = vmul.f32 %v133, %v144
    %v159 = vmul.f32 %v135, %v144
    %v160 = vmul.f32 %v137, %v144
    %v161 = vmul.f32 %v139, %v144
    %v162 = vsel %vm43, %v146, 0.0
    %163 = vadd.xlane.f32.xlu0 %v162
    %v164 = vpop.xlane.xlu0 %163
    %v165 = vsel %vm43, %v147, 0.0
    %166 = vadd.xlane.f32.xlu0 %v165
    %v167 = vpop.xlane.xlu0 %166
    %v168 = vsel %vm43, %v148, 0.0
    %169 = vadd.xlane.f32.xlu0 %v168
    %v170 = vpop.xlane.xlu0 %169
    %v171 = vsel %vm43, %v149, 0.0
    %172 = vadd.xlane.f32.xlu0 %v171
    %v173 = vpop.xlane.xlu0 %172
    %v174 = vsel %vm43, %v150, 0.0
    %175 = vadd.xlane.f32.xlu0 %v174
    %v176 = vpop.xlane.xlu0 %175
    %v177 = vsel %vm43, %v151, 0.0
    %178 = vadd.xlane.f32.xlu0 %v177
    %v179 = vpop.xlane.xlu0 %178
    %v180 = vsel %vm43, %v152, 0.0
    %181 = vadd.xlane.f32.xlu0 %v180
    %v182 = vpop.xlane.xlu0 %181
    %v183 = vsel %vm43, %v153, 0.0
    %184 = vadd.xlane.f32.xlu0 %v183
    %v185 = vpop.xlane.xlu0 %184
    %v186 = vsel %vm43, %v154, 0.0
    %187 = vadd.xlane.f32.xlu0 %v186
    %v188 = vpop.xlane.xlu0 %187
    %v189 = vsel %vm43, %v155, 0.0
    %190 = vadd.xlane.f32.xlu0 %v189
    %v191 = vpop.xlane.xlu0 %190
    %v192 = vsel %vm43, %v156, 0.0
    %193 = vadd.xlane.f32.xlu0 %v192
    %v194 = vpop.xlane.xlu0 %193
    %v195 = vsel %vm43, %v157, 0.0
    %196 = vadd.xlane.f32.xlu0 %v195
    %v197 = vpop.xlane.xlu0 %196
    %v198 = vsel %vm43, %v158, 0.0
    %199 = vadd.xlane.f32.xlu0 %v198
    %v200 = vpop.xlane.xlu0 %199
    %v201 = vsel %vm43, %v159, 0.0
    %202 = vadd.xlane.f32.xlu0 %v201
    %v203 = vpop.xlane.xlu0 %202
    %v204 = vsel %vm43, %v160, 0.0
    %205 = vadd.xlane.f32.xlu0 %v204
    %v206 = vpop.xlane.xlu0 %205
    %v207 = vsel %vm43, %v161, 0.0
    %208 = vadd.xlane.f32.xlu0 %v207
    %v209 = vpop.xlane.xlu0 %208
    %v210 = vsel %vm43, %v109, 0.0
    %211 = vadd.xlane.f32.xlu0 %v210
    %v212 = vpop.xlane.xlu0 %211
    %v213 = vsel %vm43, %v111, 0.0
    %214 = vadd.xlane.f32.xlu0 %v213
    %v215 = vpop.xlane.xlu0 %214
    %v216 = vsel %vm43, %v113, 0.0
    %217 = vadd.xlane.f32.xlu0 %v216
    %v218 = vpop.xlane.xlu0 %217
    %v219 = vsel %vm43, %v115, 0.0
    %220 = vadd.xlane.f32.xlu0 %v219
    %v221 = vpop.xlane.xlu0 %220
    %v222 = vsel %vm43, %v117, 0.0
    %223 = vadd.xlane.f32.xlu0 %v222
    %v224 = vpop.xlane.xlu0 %223
    %v225 = vsel %vm43, %v119, 0.0
    %226 = vadd.xlane.f32.xlu0 %v225
    %v227 = vpop.xlane.xlu0 %226
    %v228 = vsel %vm43, %v121, 0.0
    %229 = vadd.xlane.f32.xlu0 %v228
    %v230 = vpop.xlane.xlu0 %229
    %v231 = vsel %vm43, %v123, 0.0
    %232 = vadd.xlane.f32.xlu0 %v231
    %v233 = vpop.xlane.xlu0 %232
    %v234 = vsel %vm43, %v125, 0.0
    %235 = vadd.xlane.f32.xlu0 %v234
    %v236 = vpop.xlane.xlu0 %235
    %v237 = vsel %vm43, %v127, 0.0
    %238 = vadd.xlane.f32.xlu0 %v237
    %v239 = vpop.xlane.xlu0 %238
    %v240 = vsel %vm43, %v129, 0.0
    %241 = vadd.xlane.f32.xlu0 %v240
    %v242 = vpop.xlane.xlu0 %241
    %v243 = vsel %vm43, %v131, 0.0
    %244 = vadd.xlane.f32.xlu0 %v243
    %v245 = vpop.xlane.xlu0 %244
    %v246 = vsel %vm43, %v133, 0.0
    %247 = vadd.xlane.f32.xlu0 %v246
    %v248 = vpop.xlane.xlu0 %247
    %v249 = vsel %vm43, %v135, 0.0
    %250 = vadd.xlane.f32.xlu0 %v249
    %v251 = vpop.xlane.xlu0 %250
    %v252 = vsel %vm43, %v137, 0.0
    %253 = vadd.xlane.f32.xlu0 %v252
    %v254 = vpop.xlane.xlu0 %253
    %v255 = vsel %vm43, %v139, 0.0
    %256 = vadd.xlane.f32.xlu0 %v255
    %v257 = vpop.xlane.xlu0 %256
    %v258 = vrcp.pop %v212
    %v259 = vrcp.pop %v215
    %v260 = vrcp.pop %v218
    %v261 = vrcp.pop %v221
    %v262 = vrcp.pop %v224
    %v263 = vrcp.pop %v227
    %v264 = vrcp.pop %v230
    %v265 = vrcp.pop %v233
    %v266 = vrcp.pop %v236
    %v267 = vrcp.pop %v239
    %v268 = vrcp.pop %v242
    %v269 = vrcp.pop %v245
    %v270 = vrcp.pop %v248
    %v271 = vrcp.pop %v251
    %v272 = vrcp.pop %v254
    %v273 = vrcp.pop %v257
    %v274 = vmul.f32 %v164, %v258
    %v275 = vmul.f32 %v167, %v259
    %v276 = vmul.f32 %v170, %v260
    %v277 = vmul.f32 %v173, %v261
    %v278 = vmul.f32 %v176, %v262
    %v279 = vmul.f32 %v179, %v263
    %v280 = vmul.f32 %v182, %v264
    %v281 = vmul.f32 %v185, %v265
    %v282 = vmul.f32 %v188, %v266
    %v283 = vmul.f32 %v191, %v267
    %v284 = vmul.f32 %v194, %v268
    %v285 = vmul.f32 %v197, %v269
    %v286 = vmul.f32 %v200, %v270
    %v287 = vmul.f32 %v203, %v271
    %v288 = vmul.f32 %v206, %v272
    %v289 = vmul.f32 %v209, %v273
    %s290 = smul.u32 0, 128
    %v291 = vlaneseq
    %v292 = vshrl.u32 %v291, 7
    %v293 = vadd.s32 %v292, 8
    %v294 = vadd.s32 %v292, 16
    %v295 = vadd.s32 %v292, 24
    %v296 = vadd.s32 %v292, 32
    %v297 = vadd.s32 %v292, 40
    %v298 = vadd.s32 %v292, 48
    %v299 = vadd.s32 %v292, 56
    %v300 = vadd.s32 %v292, 64
    %v301 = vadd.s32 %v292, 72
    %v302 = vadd.s32 %v292, 80
    %v303 = vadd.s32 %v292, 88
    %v304 = vadd.s32 %v292, 96
    %v305 = vadd.s32 %v292, 104
    %v306 = vadd.s32 %v292, 112
    %v307 = vadd.s32 %v292, 120
    %v308 = vstv %s290
    %v309 = vadd.s32 %v292, %v308
    %v310 = vadd.s32 %v293, %v308
    %v311 = vadd.s32 %v294, %v308
    %v312 = vadd.s32 %v295, %v308
    %v313 = vadd.s32 %v296, %v308
    %v314 = vadd.s32 %v297, %v308
    %v315 = vadd.s32 %v298, %v308
    %v316 = vadd.s32 %v299, %v308
    %v317 = vadd.s32 %v300, %v308
    %v318 = vadd.s32 %v301, %v308
    %v319 = vadd.s32 %v302, %v308
    %v320 = vadd.s32 %v303, %v308
    %v321 = vadd.s32 %v304, %v308
    %v322 = vadd.s32 %v305, %v308
    %v323 = vadd.s32 %v306, %v308
    %v324 = vadd.s32 %v307, %v308
    %v325 = vlaneseq
    %v326 = vand.u32 %v325, 127
    %v327 = vadd.s32 %v326, %v308
    %vm328 = vcmp.lt.s32.totalorder %v309, 8
    %vm329 = vcmp.lt.s32.totalorder %v310, 8
    %vm330 = vcmp.lt.s32.totalorder %v311, 8
    %vm331 = vcmp.lt.s32.totalorder %v312, 8
    %vm332 = vcmp.lt.s32.totalorder %v313, 8
    %vm333 = vcmp.lt.s32.totalorder %v314, 8
    %vm334 = vcmp.lt.s32.totalorder %v315, 8
    %vm335 = vcmp.lt.s32.totalorder %v316, 8
    %vm336 = vcmp.lt.s32.totalorder %v317, 8
    %vm337 = vcmp.lt.s32.totalorder %v318, 8
    %vm338 = vcmp.lt.s32.totalorder %v319, 8
    %vm339 = vcmp.lt.s32.totalorder %v320, 8
    %vm340 = vcmp.lt.s32.totalorder %v321, 8
    %vm341 = vcmp.lt.s32.totalorder %v322, 8
    %vm342 = vcmp.lt.s32.totalorder %v323, 8
    %vm343 = vcmp.lt.s32.totalorder %v324, 8
    %v344 = vsel %vm328, %v274, 0.0
    %v345 = vsel %vm329, %v275, 0.0
    %v346 = vsel %vm330, %v276, 0.0
    %v347 = vsel %vm331, %v277, 0.0
    %v348 = vsel %vm332, %v278, 0.0
    %v349 = vsel %vm333, %v279, 0.0
    %v350 = vsel %vm334, %v280, 0.0
    %v351 = vsel %vm335, %v281, 0.0
    %v352 = vsel %vm336, %v282, 0.0
    %v353 = vsel %vm337, %v283, 0.0
    %v354 = vsel %vm338, %v284, 0.0
    %v355 = vsel %vm339, %v285, 0.0
    %v356 = vsel %vm340, %v286, 0.0
    %v357 = vsel %vm341, %v287, 0.0
    %v358 = vsel %vm342, %v288, 0.0
    %v359 = vsel %vm343, %v289, 0.0
    %vm360 = vcmp.lt.s32.totalorder %v327, 8
    %v361 = vsel %vm360, %v41, 0.0
    %v362 = vld [vmem:[#allocation2] sm:$0x1]
    %vm363 = vcmask 7168
    %v364 = vsel %vm363, %v344, 0.0
    %v365 = vsel %vm363, %v345, 0.0
    %v366 = vadd.f32 %v364, %v365
    %v367 = vsel %vm363, %v346, 0.0
    %v368 = vadd.f32 %v366, %v367
    %v369 = vsel %vm363, %v347, 0.0
    %v370 = vadd.f32 %v368, %v369
    %v371 = vsel %vm363, %v348, 0.0
    %v372 = vadd.f32 %v370, %v371
    %v373 = vsel %vm363, %v349, 0.0
    %v374 = vadd.f32 %v372, %v373
    %v375 = vsel %vm363, %v350, 0.0
    %v376 = vadd.f32 %v374, %v375
    %v377 = vsel %vm363, %v351, 0.0
    %v378 = vadd.f32 %v376, %v377
    %v379 = vsel %vm363, %v352, 0.0
    %v380 = vadd.f32 %v378, %v379
    %v381 = vsel %vm363, %v353, 0.0
    %v382 = vadd.f32 %v380, %v381
    %v383 = vsel %vm363, %v354, 0.0
    %v384 = vadd.f32 %v382, %v383
    %v385 = vsel %vm363, %v355, 0.0
    %v386 = vadd.f32 %v384, %v385
    %v387 = vsel %vm363, %v356, 0.0
    %v388 = vadd.f32 %v386, %v387
    %v389 = vsel %vm363, %v357, 0.0
    %v390 = vadd.f32 %v388, %v389
    %v391 = vsel %vm363, %v358, 0.0
    %v392 = vadd.f32 %v390, %v391
    %v393 = vsel %vm363, %v359, 0.0
    %v394 = vadd.f32 %v392, %v393
    %395 = vadd.xlane.f32.xlu0 %v394
    %v396 = vpop.xlane.xlu0 %395
    %v397 = vrot.slane %v396, 4
    %v398 = vadd.f32 %v396, %v397
    %v399 = vrot.slane %v398, 2
    %v400 = vadd.f32 %v398, %v399
    %v401 = vrot.slane %v400, 1
    %v402 = vadd.f32 %v400, %v401
    %s403 = vtos %v402
    %v404 = vstv %s403
    %v405 = vadd.f32 %v362, %v404
    %vm406 = vcmask 0
    %407 = vst.msk [vmem:[#allocation2] sm:$0x1] %vm406, %v405
    %v408 = vld [vmem:[#allocation4] sm:$0x1]
    %v409 = vmul.f32 %v344, %v344
    %v410 = vmul.f32 %v345, %v345
    %v411 = vmul.f32 %v346, %v346
    %v412 = vmul.f32 %v347, %v347
    %v413 = vmul.f32 %v348, %v348
    %v414 = vmul.f32 %v349, %v349
    %v415 = vmul.f32 %v350, %v350
    %v416 = vmul.f32 %v351, %v351
    %v417 = vmul.f32 %v352, %v352
    %v418 = vmul.f32 %v353, %v353
    %v419 = vmul.f32 %v354, %v354
    %v420 = vmul.f32 %v355, %v355
    %v421 = vmul.f32 %v356, %v356
    %v422 = vmul.f32 %v357, %v357
    %v423 = vmul.f32 %v358, %v358
    %v424 = vmul.f32 %v359, %v359
    %v425 = vsel %vm363, %v409, 0.0
    %v426 = vsel %vm363, %v410, 0.0
    %v427 = vadd.f32 %v425, %v426
    %v428 = vsel %vm363, %v411, 0.0
    %v429 = vadd.f32 %v427, %v428
    %v430 = vsel %vm363, %v412, 0.0
    %v431 = vadd.f32 %v429, %v430
    %v432 = vsel %vm363, %v413, 0.0
    %v433 = vadd.f32 %v431, %v432
    %v434 = vsel %vm363, %v414, 0.0
    %v435 = vadd.f32 %v433, %v434
    %v436 = vsel %vm363, %v415, 0.0
    %v437 = vadd.f32 %v435, %v436
    %v438 = vsel %vm363, %v416, 0.0
    %v439 = vadd.f32 %v437, %v438
    %v440 = vsel %vm363, %v417, 0.0
    %v441 = vadd.f32 %v439, %v440
    %v442 = vsel %vm363, %v418, 0.0
    %v443 = vadd.f32 %v441, %v442
    %v444 = vsel %vm363, %v419, 0.0
    %v445 = vadd.f32 %v443, %v444
    %v446 = vsel %vm363, %v420, 0.0
    %v447 = vadd.f32 %v445, %v446
    %v448 = vsel %vm363, %v421, 0.0
    %v449 = vadd.f32 %v447, %v448
    %v450 = vsel %vm363, %v422, 0.0
    %v451 = vadd.f32 %v449, %v450
    %v452 = vsel %vm363, %v423, 0.0
    %v453 = vadd.f32 %v451, %v452
    %v454 = vsel %vm363, %v424, 0.0
    %v455 = vadd.f32 %v453, %v454
    %456 = vadd.xlane.f32.xlu0 %v455
    %v457 = vpop.xlane.xlu0 %456
    %v458 = vrot.slane %v457, 4
    %v459 = vadd.f32 %v457, %v458
    %v460 = vrot.slane %v459, 2
    %v461 = vadd.f32 %v459, %v460
    %v462 = vrot.slane %v461, 1
    %v463 = vadd.f32 %v461, %v462
    %s464 = vtos %v463
    %v465 = vstv %s464
    %v466 = vadd.f32 %v408, %v465
    %467 = vst.msk [vmem:[#allocation4] sm:$0x1] %vm406, %v466
    %v468 = vld [vmem:[#allocation3] sm:$0x1]
    %vm469 = vcmask 1040384
    %v470 = vsel %vm469, %v361, 0.0
    %471 = vadd.xlane.f32.xlu0 %v470
    %v472 = vpop.xlane.xlu0 %471
    %v473 = vrot.slane %v472, 4
    %v474 = vadd.f32 %v472, %v473
    %v475 = vrot.slane %v474, 2
    %v476 = vadd.f32 %v474, %v475
    %v477 = vrot.slane %v476, 1
    %v478 = vadd.f32 %v476, %v477
    %s479 = vtos %v478
    %v480 = vstv %s479
    %v481 = vadd.f32 %v468, %v480
    %482 = vst.msk [vmem:[#allocation3] sm:$0x1] %vm406, %v481
    %v483 = vld [vmem:[#allocation5] sm:$0x1]
    %v484 = vmul.f32 %v361, %v361
    %v485 = vsel %vm469, %v484, 0.0
    %486 = vadd.xlane.f32.xlu0 %v485
    %v487 = vpop.xlane.xlu0 %486
    %v488 = vrot.slane %v487, 4
    %v489 = vadd.f32 %v487, %v488
    %v490 = vrot.slane %v489, 2
    %v491 = vadd.f32 %v489, %v490
    %v492 = vrot.slane %v491, 1
    %v493 = vadd.f32 %v491, %v492
    %s494 = vtos %v493
    %v495 = vstv %s494
    %v496 = vadd.f32 %v483, %v495
    %497 = vst.msk [vmem:[#allocation5] sm:$0x1] %vm406, %v496
    %v498 = vld [vmem:[#allocation6] sm:$0x1]
    %499 = vmatprep.subr.mxu0 0.0
    %500 = vmatpush1.msra.mxu0 %v359
    %501 = vmatprep.subr.mxu0 0.0
    %502 = vmatpush1.msra.mxu0 %v358
    %503 = vmatprep.subr.mxu0 0.0
    %504 = vmatpush1.msra.mxu0 %v357
    %505 = vmatprep.subr.mxu0 0.0
    %506 = vmatpush1.msra.mxu0 %v356
    %507 = vmatprep.subr.mxu0 0.0
    %508 = vmatpush1.msra.mxu0 %v355
    %509 = vmatprep.subr.mxu0 0.0
    %510 = vmatpush1.msra.mxu0 %v354
    %511 = vmatprep.subr.mxu0 0.0
    %512 = vmatpush1.msra.mxu0 %v353
    %513 = vmatprep.subr.mxu0 0.0
    %514 = vmatpush1.msra.mxu0 %v352
    %515 = vmatprep.subr.mxu0 0.0
    %516 = vmatpush1.msra.mxu0 %v351
    %517 = vmatprep.subr.mxu0 0.0
    %518 = vmatpush1.msra.mxu0 %v350
    %519 = vmatprep.subr.mxu0 0.0
    %520 = vmatpush1.msra.mxu0 %v349
    %521 = vmatprep.subr.mxu0 0.0
    %522 = vmatpush1.msra.mxu0 %v348
    %523 = vmatprep.subr.mxu0 0.0
    %524 = vmatpush1.msra.mxu0 %v347
    %525 = vmatprep.subr.mxu0 0.0
    %526 = vmatpush1.msra.mxu0 %v346
    %527 = vmatprep.subr.mxu0 0.0
    %528 = vmatpush1.msra.mxu0 %v345
    %529 = vmatprep.subr.mxu0 0.0
    %530 = vmatpush1.msra.mxu0 %v344
    %531 = vmatprep.subr.mxu0 0.0
    %532 = vmatpush2.msra.mxu0 0.0
    %533 = vmatprep.subr.mxu0 0.0
    %534 = vmatpush2.msra.mxu0 0.0
    %535 = vmatprep.subr.mxu0 0.0
    %536 = vmatpush2.msra.mxu0 0.0
    %537 = vmatprep.subr.mxu0 0.0
    %538 = vmatpush2.msra.mxu0 0.0
    %539 = vmatprep.subr.mxu0 0.0
    %540 = vmatpush2.msra.mxu0 0.0
    %541 = vmatprep.subr.mxu0 0.0
    %542 = vmatpush2.msra.mxu0 0.0
    %543 = vmatprep.subr.mxu0 0.0
    %544 = vmatpush2.msra.mxu0 0.0
    %545 = vmatprep.subr.mxu0 0.0
    %546 = vmatpush2.msra.mxu0 0.0
    %547 = vmatprep.subr.mxu0 0.0
    %548 = vmatpush2.msra.mxu0 0.0
    %549 = vmatprep.subr.mxu0 0.0
    %550 = vmatpush2.msra.mxu0 0.0
    %551 = vmatprep.subr.mxu0 0.0
    %552 = vmatpush2.msra.mxu0 0.0
    %553 = vmatprep.subr.mxu0 0.0
    %554 = vmatpush2.msra.mxu0 0.0
    %555 = vmatprep.subr.mxu0 0.0
    %556 = vmatpush2.msra.mxu0 0.0
    %557 = vmatprep.subr.mxu0 0.0
    %558 = vmatpush2.msra.mxu0 0.0
    %559 = vmatprep.subr.mxu0 0.0
    %560 = vmatpush2.msra.mxu0 0.0
    %561 = vmatprep.subr.mxu0 0.0
    %562 = vmatpush2.msra.mxu0 0.0
    %563 = vmatprep.mubr.f32.mxu0 0.0
    %564 = vmatmul.mubr.f32.gmra.mxu0 %v361
    %v565 = vpop.f32.mrf.mxu0
    %v566 = vadd.f32 0.0, %v565
    %v567 = vpop.f32.mrf.mxu0
    %568 = vdwg.mxu0
    %v569 = vadd.f32 %v498, %v566
    %570 = vst.msk [vmem:[#allocation6] sm:$0x1] %vm406, %v569
    // Predicated region
    $region18: #{tpu_custom_call.1} parent=1 // pred_check
      %p571 = pneg %p15
    $region19: #{tpu_custom_call.1} parent=1 // pred_check_branch
      %573 = sbr.rel (%p571) target = $region21
    $region20: #{tpu_custom_call.1} parent=1 // pred_region
      %v574 = vld [vmem:[#allocation2] sm:$0x1]
      %v575 = vld [vmem:[#allocation3] sm:$0x1]
      %v576 = vld [vmem:[#allocation4] sm:$0x1]
      %v577 = vld [vmem:[#allocation5] sm:$0x1]
      %v578 = vld [vmem:[#allocation6] sm:$0x1]
      %v579 = vrcp.pop 8.0
      %v580 = vmul.f32 %v574, %v579
      %v581 = vmul.f32 %v575, %v579
      %v582 = vmul.f32 %v574, %v574
      %v583 = vmul.f32 %v582, %v579
      %v584 = vsub.f32 %v576, %v583
      %v585 = vmax.f32 %v584, 0.0
      %v586 = vmul.f32 %v575, %v575
      %v587 = vmul.f32 %v586, %v579
      %v588 = vsub.f32 %v577, %v587
      %v589 = vmax.f32 %v588, 0.0
      %v590 = vmul.f32 %v574, %v575
      %v591 = vmul.f32 %v590, %v579
      %v592 = vsub.f32 %v578, %v591
      %v593 = vrsqrt.pop %v585
      %v594 = vmul.f32 %v585, %v593
      %vm595 = vcmp.eq.f32.partialorder %v585, inf
      %v596 = vsel %vm595, %v585, %v594
      %vm597 = vcmp.eq.f32.partialorder %v585, 0.0
      %v598 = vand.u32 %v585, 2147483648
      %v599 = vsel %vm597, %v598, %v596
      %v600 = vrsqrt.pop %v589
      %v601 = vmul.f32 %v589, %v600
      %vm602 = vcmp.eq.f32.partialorder %v589, inf
      %v603 = vsel %vm602, %v589, %v601
      %vm604 = vcmp.eq.f32.partialorder %v589, 0.0
      %v605 = vand.u32 %v589, 2147483648
      %v606 = vsel %vm604, %v605, %v603
      %v607 = vmul.f32 %v599, %v606
      %v608 = vadd.f32 %v607, 1e-08
      %v609 = vrcp.pop %v608
      %v610 = vmul.f32 %v592, %v609
      %v611 = vrcp.pop 7.0
      %v612 = vmul.f32 %v585, %v611
      %v613 = vmul.f32 %v589, %v611
      %v614 = vrsqrt.pop %v612
      %v615 = vmul.f32 %v612, %v614
      %vm616 = vcmp.eq.f32.partialorder %v612, inf
      %v617 = vsel %vm616, %v612, %v615
      %vm618 = vcmp.eq.f32.partialorder %v612, 0.0
      %v619 = vand.u32 %v612, 2147483648
      %v620 = vsel %vm618, %v619, %v617
      %v621 = vrsqrt.pop %v613
      %v622 = vmul.f32 %v613, %v621
      %vm623 = vcmp.eq.f32.partialorder %v613, inf
      %v624 = vsel %vm623, %v613, %v622
      %vm625 = vcmp.eq.f32.partialorder %v613, 0.0
      %v626 = vand.u32 %v613, 2147483648
      %v627 = vsel %vm625, %v626, %v624
      %v628 = vmul.f32 %v610, 2.0
      %v629 = vmul.f32 %v628, %v620
      %v630 = vmul.f32 %v629, %v627
      %v631 = vadd.f32 %v612, %v613
      %v632 = vsub.f32 %v580, %v581
      %v633 = vmul.f32 %v632, %v632
      %v634 = vadd.f32 %v631, %v633
      %v635 = vadd.f32 %v634, 1e-08
      %v636 = vrcp.pop %v635
      %v637 = vmul.f32 %v630, %v636
      %v638 = vsub.f32 1.0, %v637
      %639 = vst.msk [vmem:[#allocation7] sm:$0x1] %vm406, %v638
    $region21: #{tpu_custom_call.1} parent=1 // pred_fallthru
      _
    // Predicated region
    $region22: #{tpu_custom_call.1} parent=1 // pred_check
      _
    $region23: #{tpu_custom_call.1} parent=1 // pred_check_branch
      %641 = sbr.rel (0) target = $region25
    $region24: #{tpu_custom_call.1} parent=1 // pred_region
      %s643 = ssub.s32 16, 16
      %644 = vsyncadd [#allocation8], %s643
      %s646 = sshll.u32 [#allocation7], 4
      %s647 = int_to_ptr.vmem [resolvable:$true] %s646
      %649 = dma.vmem_to_hbm [thread:$0]  %s647, 16, %s3, [#allocation8]
    $region25: #{tpu_custom_call.1} parent=1 // pred_fallthru
      _
    // Predicated region
    $region26: #{tpu_custom_call.1} parent=1 // pred_check
      _
    $region27: #{tpu_custom_call.1} parent=1 // pred_check_branch
      %651 = sbr.rel (0) target = $region29
    $region28: #{tpu_custom_call.1} parent=1 // pred_region
      %652 = dma.done [#allocation8], 16
    $region29: #{tpu_custom_call.1} parent=1 // pred_fallthru
      _
    %653 = vsyncpa [#allocation8], 1

</llo_original>
